<compile_context>
chip_gen: v5e
topology: v5e:2x2
jax: 0.10.0
libtpu: 0.0.40
codegen_flags: <defaults>
</compile_context>

<pallas_src>
import jax
import jax.numpy as jnp
from jax.experimental import pallas as pl
from jax.experimental.pallas import tpu as pltpu

NUM_CLASSES = 3
CLASS_WEIGHTS = (3.8, 3.8, 1.0)     # hard-coded in weighted_cross_entropy_loss
SMOOTH = 1e-6

_LANE = 128
_LOSS_MAX_TILE_ROWS = 512           # 512 rows * 128 lanes = 65536 samples / grid step
_LOSS_N_CORES = 2                   # leading "parallel" axis (v7x dual TensorCore)
_LOSS_OUT_ROWS = 2 + 2 * NUM_CLASSES        # [w*nll | w | tp_c | pp_c] partial rows (= 8)
_NORM_MAX_BLOCK_ROWS = 8192         # 8192 * 128 elems = 4 MiB f32 per norm grid step


def _cdiv(a, b):
    return -(-a // b)


def _round_up(x, m):
    return _cdiv(x, m) * m


# ----------------------------------------------------------------------------
# Kernel 1: weighted CE + multi-class precision partial sums.
# Block layout per grid step (core, i):
#   logits  (C, TB, 128)   targets (1, TB, 128) int32  (-1 marks batch padding)
# Accumulators are dense (full-vreg) VMEM scratch; each core writes one
# (OUT_ROWS, 128) lane-partial slab at its last step.
# ----------------------------------------------------------------------------
def _loss_kernel(logits_ref, tgt_ref, out_ref, wnll_acc, w_acc, tp_acc, pp_acc):
    i = pl.program_id(1)

    @pl.when(i == 0)
    def _init():
        wnll_acc[...] = jnp.zeros_like(wnll_acc)
        w_acc[...] = jnp.zeros_like(w_acc)
        tp_acc[...] = jnp.zeros_like(tp_acc)
        pp_acc[...] = jnp.zeros_like(pp_acc)

    x = logits_ref[...].astype(jnp.float32)            # (C, TB, 128)
    t = tgt_ref[...]                                    # (1, TB, 128) int32
    t2 = t[0]                                           # (TB, 128)

    cls = jax.lax.broadcasted_iota(jnp.int32, x.shape, 0)       # (C, TB, 128)
    oh = (cls == t).astype(jnp.float32)                 # one-hot; all-zero for padding
    valid = (t2 >= 0).astype(jnp.float32)               # (TB, 128)

    # numerically stable softmax; class-axis max/sum are elementwise over the
    # 3 leading slabs (VPU, no XLU sublane reduce).
    m = jnp.max(x, axis=0)                              # (TB, 128)
    e = jnp.exp(x - m[None])                            # (C, TB, 128)
    se = jnp.sum(e, axis=0)                             # (TB, 128)
    lse = m + jnp.log(se)                               # (TB, 128)
    inv_se = pl.reciprocal(se, approx=True)             # EUP slot, not VALU divide
    probs = e * inv_se[None]                            # (C, TB, 128)

    # ---- weighted cross entropy pieces ----
    logit_t = jnp.sum(oh * x, axis=0)                   # (TB, 128)
    nll = lse - logit_t                                  # -log p(target)
    w_i = jnp.zeros_like(valid)                          # padded samples stay 0
    for c_idx in range(NUM_CLASSES):
        w_i = jnp.where(t2 == c_idx, jnp.float32(CLASS_WEIGHTS[c_idx]), w_i)
    wnll_acc[...] += w_i * nll
    w_acc[...] += w_i

    # ---- multi-class precision pieces (soft tp / predicted positives) ----
    pv = probs * valid[None]                             # zero out padding
    tp_acc[...] += pv * oh
    pp_acc[...] += pv

    @pl.when(i == pl.num_programs(1) - 1)
    def _finalize():
        out_ref[0, 0:1, :] = jnp.sum(wnll_acc[...], axis=0, keepdims=True)
        out_ref[0, 1:2, :] = jnp.sum(w_acc[...], axis=0, keepdims=True)
        out_ref[0, 2:2 + NUM_CLASSES, :] = jnp.sum(tp_acc[...], axis=1)
        out_ref[0, 2 + NUM_CLASSES:2 + 2 * NUM_CLASSES, :] = jnp.sum(pp_acc[...], axis=1)


def ce_and_precision_loss(outputs, targets):
    n, c = outputs.shape
    assert c == NUM_CLASSES

    nb = _cdiv(n, _LANE)                                  # 128-lane sample rows
    rows_per_core = _cdiv(nb, _LOSS_N_CORES)
    steps = _cdiv(rows_per_core, _LOSS_MAX_TILE_ROWS)
    tile_rows = _round_up(_cdiv(rows_per_core, steps), 8)
    nb_pad = _LOSS_N_CORES * steps * tile_rows
    n_pad = nb_pad * _LANE

    # (N, C) -> sublane/lane-dense (C, NB, 128); pad batch with logits=0, target=-1.
    x = outputs
    t = targets.astype(jnp.int32)
    if n_pad != n:
        x = jnp.pad(x, ((0, n_pad - n), (0, 0)))
        t = jnp.pad(t, (0, n_pad - n), constant_values=-1)
    logits = jnp.transpose(x).reshape(c, nb_pad, _LANE)
    tgt = t.reshape(1, nb_pad, _LANE)

    # Explicit VMEM budget (double-buffered inputs + accumulators + output),
    # kept well below the v7x 32 MiB scoped / 64 MiB physical limit.
    vmem_bytes = (2 * c * tile_rows * _LANE * outputs.dtype.itemsize      # logits
                  + 2 * tile_rows * _LANE * 4                             # targets
                  + (2 + 2 * c) * tile_rows * _LANE * 4                   # accumulators
                  + 2 * _LOSS_OUT_ROWS * _LANE * 4)                       # output
    vmem_limit = min(max(int(vmem_bytes * 2), 8 * 2**20), 28 * 2**20)

    res = pl.pallas_call(
        _loss_kernel,
        out_shape=jax.ShapeDtypeStruct((_LOSS_N_CORES, _LOSS_OUT_ROWS, _LANE),
                                       jnp.float32),
        grid_spec=pltpu.PrefetchScalarGridSpec(
            num_scalar_prefetch=0,
            grid=(_LOSS_N_CORES, steps),
            in_specs=[
                pl.BlockSpec((c, tile_rows, _LANE),
                             lambda core, i: (0, core * steps + i, 0)),
                pl.BlockSpec((1, tile_rows, _LANE),
                             lambda core, i: (0, core * steps + i, 0)),
            ],
            out_specs=pl.BlockSpec((1, _LOSS_OUT_ROWS, _LANE),
                                   lambda core, i: (core, 0, 0)),
            scratch_shapes=[
                pltpu.VMEM((tile_rows, _LANE), jnp.float32),      # sum w*nll
                pltpu.VMEM((tile_rows, _LANE), jnp.float32),      # sum w
                pltpu.VMEM((c, tile_rows, _LANE), jnp.float32),   # tp per class
                pltpu.VMEM((c, tile_rows, _LANE), jnp.float32),   # pp per class
            ]),
        compiler_params=pltpu.CompilerParams(
            dimension_semantics=("parallel", "arbitrary"),
            vmem_limit_bytes=vmem_limit),
    )(logits, tgt)

    parts = jnp.sum(res, axis=(0, 2))                     # (OUT_ROWS,) combine cores+lanes
    ce = parts[0] / parts[1]
    tp = parts[2:2 + NUM_CLASSES]
    pp = parts[2 + NUM_CLASSES:2 + 2 * NUM_CLASSES]
    pr = 1.0 - jnp.mean(tp / (pp + SMOOTH))
    return ce, pr


# ----------------------------------------------------------------------------
# Kernel 2: per-block lane partials of [sum|w|, sum w^2] for ONE parameter.
# Params are DMA'd in their native (narrow) dtype and cast to f32 in-kernel.
# ----------------------------------------------------------------------------
def _norm_kernel(w_ref, out_ref):
    w = w_ref[...].astype(jnp.float32)                   # (block_rows, 128)
    out_ref[0, 0:1, :] = jnp.sum(jnp.abs(w), axis=0, keepdims=True)   # |w| lane partials
    out_ref[0, 1:2, :] = jnp.sum(w * w, axis=0, keepdims=True)        # w^2 lane partials


def _param_norm_sums(p):
    """Return (sum|p|, sum p^2) for one parameter using large HBM-bound blocks."""
    flat = jnp.ravel(p)                                   # keep narrow dtype
    s = flat.size
    rows = _cdiv(s, _LANE)
    if rows * _LANE != s:
        flat = jnp.pad(flat, (0, rows * _LANE - s))       # zeros don't change the sums
    if rows <= _NORM_MAX_BLOCK_ROWS:
        block_rows, n_blocks = rows, 1
    else:
        block_rows = _NORM_MAX_BLOCK_ROWS
        n_blocks = _cdiv(rows, block_rows)
        if n_blocks * block_rows != rows:
            flat = jnp.pad(flat, (0, (n_blocks * block_rows - rows) * _LANE))
            rows = n_blocks * block_rows
    buf = flat.reshape(rows, _LANE)

    vmem_bytes = 2 * block_rows * _LANE * p.dtype.itemsize + 2 * 2 * _LANE * 4
    vmem_limit = min(max(int(vmem_bytes * 2), 8 * 2**20), 28 * 2**20)

    out = pl.pallas_call(
        _norm_kernel,
        out_shape=jax.ShapeDtypeStruct((n_blocks, 2, _LANE), jnp.float32),
        grid_spec=pltpu.PrefetchScalarGridSpec(
            num_scalar_prefetch=0,
            grid=(n_blocks,),
            in_specs=[pl.BlockSpec((block_rows, _LANE), lambda i: (i, 0))],
            out_specs=pl.BlockSpec((1, 2, _LANE), lambda i: (i, 0, 0))),
        compiler_params=pltpu.CompilerParams(
            dimension_semantics=("parallel",),
            vmem_limit_bytes=vmem_limit),
    )(buf)
    return jnp.sum(out[:, 0, :]), jnp.sum(out[:, 1, :])


# ----------------------------------------------------------------------------
# adjusted_loss_fn forward
# ----------------------------------------------------------------------------
def adjusted_loss_fn(outputs, targets, model_params,
                     weight=0.5, l1_weight=0.01, l2_weight=0.01):
    ce_loss, pr_loss = ce_and_precision_loss(outputs, targets)
    combined = weight * pr_loss + (1.0 - weight) * ce_loss

    l1_reg = jnp.float32(0.0)
    l2_reg = jnp.float32(0.0)
    for name, p in model_params.items():
        if "weight" in name:
            s1, s2 = _param_norm_sums(p)
            l1_reg = l1_reg + s1                          # ||p||_1
            l2_reg = l2_reg + jnp.sqrt(s2)                # ||p||_2 (Frobenius)

    return combined + l1_weight * l1_reg + l2_weight * l2_reg


# ----------------------------------------------------------------------------
# Pure-JAX reference (correctness check only)
# ----------------------------------------------------------------------------
def _reference_loss(outputs, targets, model_params,
                    weight=0.5, l1_weight=0.01, l2_weight=0.01):
    cw = jnp.asarray(CLASS_WEIGHTS, jnp.float32)
    x = outputs.astype(jnp.float32)
    logp = jax.nn.log_softmax(x, axis=1)
    probs = jax.nn.softmax(x, axis=1)
    oh = jax.nn.one_hot(targets, NUM_CLASSES, dtype=jnp.float32)
    w_i = cw[targets]
    ce = jnp.sum(w_i * (-jnp.sum(oh * logp, axis=1))) / jnp.sum(w_i)
    tp = jnp.sum(probs * oh, axis=0)
    pp = jnp.sum(probs, axis=0)
    pr = 1.0 - jnp.mean(tp / (pp + SMOOTH))
    combined = weight * pr + (1.0 - weight) * ce
    l1 = jnp.float32(0.0)
    l2 = jnp.float32(0.0)
    for name, p in model_params.items():
        if "weight" in name:
            pf = p.astype(jnp.float32)
            l1 = l1 + jnp.sum(jnp.abs(pf))
            l2 = l2 + jnp.sqrt(jnp.sum(pf * pf))
    return combined + l1_weight * l1 + l2_weight * l2


if __name__ == "__main__":
    key = jax.random.PRNGKey(0)
    k_out, k_tgt, k_w1, k_w2, k_w3, k_out2, k_tgt2 = jax.random.split(key, 7)

    # Small batch, matching the module's (N, num_classes=3) logits + int targets.
    N = 8
    outputs = jax.random.normal(k_out, (N, NUM_CLASSES), dtype=jnp.float32)
    targets = jax.random.randint(k_tgt, (N,), 0, NUM_CLASSES, dtype=jnp.int32)

    # Synthetic "model" parameters (only entries with 'weight' in the name
    # contribute to L1/L2 regularisation, matching model.named_parameters()).
    model_params = {
        "fc1.weight": 0.1 * jax.random.normal(k_w1, (32, 16), dtype=jnp.float32),
        "fc1.bias": jnp.zeros((32,), dtype=jnp.float32),
        "fc2.weight": 0.1 * jax.random.normal(k_w2, (NUM_CLASSES, 32), dtype=jnp.float32),
        "fc2.bias": jnp.zeros((NUM_CLASSES,), dtype=jnp.float32),
        # bf16 param exercises the narrow-dtype DMA path of the norm kernel.
        "fc3.weight": (0.1 * jax.random.normal(k_w3, (64, 32))).astype(jnp.bfloat16),
    }

    loss = adjusted_loss_fn(outputs, targets, model_params)
    loss = jax.block_until_ready(loss)
    ref = _reference_loss(outputs, targets, model_params)
    assert jnp.allclose(loss, ref, rtol=1e-3, atol=1e-3), (loss, ref)

    # Second (still small) batch that puts real samples on both "core" slices.
    N2 = 1500
    outputs2 = jax.random.normal(k_out2, (N2, NUM_CLASSES), dtype=jnp.float32)
    targets2 = jax.random.randint(k_tgt2, (N2,), 0, NUM_CLASSES, dtype=jnp.int32)
    loss2 = adjusted_loss_fn(outputs2, targets2, model_params)
    loss2 = jax.block_until_ready(loss2)
    ref2 = _reference_loss(outputs2, targets2, model_params)
    assert jnp.allclose(loss2, ref2, rtol=1e-3, atol=1e-3), (loss2, ref2)

    print("KERNEL_OK")
</pallas_src>

<mosaic_0001>
module attributes {stable_mosaic.version = 11 : i64} {
  func.func @_loss_kernel(%arg0: i32, %arg1: i32, %arg2: memref<3x8x128xf32, #tpu.memory_space<vmem>>, %arg3: memref<1x8x128xi32, #tpu.memory_space<vmem>>, %arg4: memref<1x8x128xf32, #tpu.memory_space<vmem>>, %arg5: memref<8x128xf32, #tpu.memory_space<vmem>>, %arg6: memref<8x128xf32, #tpu.memory_space<vmem>>, %arg7: memref<3x8x128xf32, #tpu.memory_space<vmem>>, %arg8: memref<3x8x128xf32, #tpu.memory_space<vmem>>) attributes {dimension_semantics = [#tpu.dimension_semantics<parallel>, #tpu.dimension_semantics<arbitrary>], iteration_bounds = array<i64: 2, 1>, scalar_prefetch = 0 : i64, scratch_operands = 4 : i64, tpu.core_type = #tpu.core_type<tc>, window_params = [{transform_indices = @transform_0, window_bounds = array<i64: 3, 8, 128>}, {transform_indices = @transform_1, window_bounds = array<i64: 1, 8, 128>}, {transform_indices = @transform_2, window_bounds = array<i64: 1, 8, 128>}]} {
    %c0_i32 = arith.constant 0 : i32
    %0 = arith.cmpi eq, %arg1, %c0_i32 : i32
    %1 = arith.extui %0 : i1 to i32
    %c0_i32_0 = arith.constant 0 : i32
    %2 = arith.cmpi ne, %1, %c0_i32_0 : i32
    scf.if %2 {
      %cst_36 = arith.constant 0.000000e+00 : f32
      %63 = vector.broadcast %cst_36 : f32 to vector<8x128xf32>
      %c0_37 = arith.constant 0 : index
      %c0_38 = arith.constant 0 : index
      %64 = vector.load %arg5[%c0_37, %c0_38] : memref<8x128xf32, #tpu.memory_space<vmem>>, vector<8x128xf32>
      tpu.vector_store %arg5[%c0_37, %c0_38], %63 {strides = array<i32>} : memref<8x128xf32, #tpu.memory_space<vmem>>, vector<8x128xf32>,
      %cst_39 = arith.constant 0.000000e+00 : f32
      %65 = vector.broadcast %cst_39 : f32 to vector<8x128xf32>
      %c0_40 = arith.constant 0 : index
      %c0_41 = arith.constant 0 : index
      %66 = vector.load %arg6[%c0_40, %c0_41] : memref<8x128xf32, #tpu.memory_space<vmem>>, vector<8x128xf32>
      tpu.vector_store %arg6[%c0_40, %c0_41], %65 {strides = array<i32>} : memref<8x128xf32, #tpu.memory_space<vmem>>, vector<8x128xf32>,
      %cst_42 = arith.constant 0.000000e+00 : f32
      %67 = vector.broadcast %cst_42 : f32 to vector<3x8x128xf32>
      %c0_43 = arith.constant 0 : index
      %c0_44 = arith.constant 0 : index
      %c0_45 = arith.constant 0 : index
      %68 = vector.load %arg7[%c0_43, %c0_44, %c0_45] : memref<3x8x128xf32, #tpu.memory_space<vmem>>, vector<3x8x128xf32>
      tpu.vector_store %arg7[%c0_43, %c0_44, %c0_45], %67 {strides = array<i32>} : memref<3x8x128xf32, #tpu.memory_space<vmem>>, vector<3x8x128xf32>,
      %cst_46 = arith.constant 0.000000e+00 : f32
      %69 = vector.broadcast %cst_46 : f32 to vector<3x8x128xf32>
      %c0_47 = arith.constant 0 : index
      %c0_48 = arith.constant 0 : index
      %c0_49 = arith.constant 0 : index
      %70 = vector.load %arg8[%c0_47, %c0_48, %c0_49] : memref<3x8x128xf32, #tpu.memory_space<vmem>>, vector<3x8x128xf32>
      tpu.vector_store %arg8[%c0_47, %c0_48, %c0_49], %69 {strides = array<i32>} : memref<3x8x128xf32, #tpu.memory_space<vmem>>, vector<3x8x128xf32>,
    } else {
    }
    %c0 = arith.constant 0 : index
    %c0_1 = arith.constant 0 : index
    %c0_2 = arith.constant 0 : index
    %3 = vector.load %arg2[%c0, %c0_1, %c0_2] : memref<3x8x128xf32, #tpu.memory_space<vmem>>, vector<3x8x128xf32>
    %c0_3 = arith.constant 0 : index
    %c0_4 = arith.constant 0 : index
    %c0_5 = arith.constant 0 : index
    %4 = vector.load %arg3[%c0_3, %c0_4, %c0_5] : memref<1x8x128xi32, #tpu.memory_space<vmem>>, vector<1x8x128xi32>
    %5 = vector.shape_cast %4 : vector<1x8x128xi32> to vector<8x128xi32>
    %6 = tpu.iota {dimensions = array<i32: 0>} : vector<3x8x128xi32>
    %7 = vector.broadcast %4 : vector<1x8x128xi32> to vector<3x8x128xi32>
    %8 = arith.cmpi eq, %6, %7 : vector<3x8x128xi32>
    %9 = arith.extui %8 : vector<3x8x128xi1> to vector<3x8x128xi32>
    %10 = arith.sitofp %9 : vector<3x8x128xi32> to vector<3x8x128xf32>
    %c0_i32_6 = arith.constant 0 : i32
    %11 = vector.broadcast %c0_i32_6 : i32 to vector<8x128xi32>
    %12 = arith.cmpi sge, %5, %11 : vector<8x128xi32>
    %13 = arith.extui %12 : vector<8x128xi1> to vector<8x128xi32>
    %14 = arith.sitofp %13 : vector<8x128xi32> to vector<8x128xf32>
    %cst = arith.constant dense<0xFF800000> : vector<8x128xf32>
    %15 = vector.multi_reduction <maximumf>, %3, %cst [0] : vector<3x8x128xf32> to vector<8x128xf32>
    %16 = vector.shape_cast %15 : vector<8x128xf32> to vector<1x8x128xf32>
    %17 = vector.broadcast %16 : vector<1x8x128xf32> to vector<3x8x128xf32>
    %18 = arith.subf %3, %17 : vector<3x8x128xf32>
    %19 = math.exp %18 : vector<3x8x128xf32>
    %cst_7 = arith.constant dense<0.000000e+00> : vector<8x128xf32>
    %20 = vector.multi_reduction <add>, %19, %cst_7 [0] : vector<3x8x128xf32> to vector<8x128xf32>
    %21 = math.log %20 : vector<8x128xf32>
    %22 = arith.addf %15, %21 : vector<8x128xf32>
    %23 = tpu.reciprocal %20 {approx = true} : vector<8x128xf32> -> vector<8x128xf32>
    %24 = vector.shape_cast %23 : vector<8x128xf32> to vector<1x8x128xf32>
    %25 = vector.broadcast %24 : vector<1x8x128xf32> to vector<3x8x128xf32>
    %26 = arith.mulf %19, %25 : vector<3x8x128xf32>
    %27 = arith.mulf %10, %3 : vector<3x8x128xf32>
    %cst_8 = arith.constant dense<0.000000e+00> : vector<8x128xf32>
    %28 = vector.multi_reduction <add>, %27, %cst_8 [0] : vector<3x8x128xf32> to vector<8x128xf32>
    %29 = arith.subf %22, %28 : vector<8x128xf32>
    %cst_9 = arith.constant 0.000000e+00 : f32
    %30 = vector.broadcast %cst_9 : f32 to vector<8x128xf32>
    %c0_i32_10 = arith.constant 0 : i32
    %31 = vector.broadcast %c0_i32_10 : i32 to vector<8x128xi32>
    %32 = arith.cmpi eq, %5, %31 : vector<8x128xi32>
    %cst_11 = arith.constant 3.800000e+00 : f32
    %33 = vector.broadcast %cst_11 : f32 to vector<8x128xf32>
    %34 = arith.select %32, %33, %30 : vector<8x128xi1>, vector<8x128xf32>
    %c1_i32 = arith.constant 1 : i32
    %35 = vector.broadcast %c1_i32 : i32 to vector<8x128xi32>
    %36 = arith.cmpi eq, %5, %35 : vector<8x128xi32>
    %cst_12 = arith.constant 3.800000e+00 : f32
    %37 = vector.broadcast %cst_12 : f32 to vector<8x128xf32>
    %38 = arith.select %36, %37, %34 : vector<8x128xi1>, vector<8x128xf32>
    %c2_i32 = arith.constant 2 : i32
    %39 = vector.broadcast %c2_i32 : i32 to vector<8x128xi32>
    %40 = arith.cmpi eq, %5, %39 : vector<8x128xi32>
    %cst_13 = arith.constant 1.000000e+00 : f32
    %41 = vector.broadcast %cst_13 : f32 to vector<8x128xf32>
    %42 = arith.select %40, %41, %38 : vector<8x128xi1>, vector<8x128xf32>
    %c0_14 = arith.constant 0 : index
    %c0_15 = arith.constant 0 : index
    %43 = vector.load %arg5[%c0_14, %c0_15] : memref<8x128xf32, #tpu.memory_space<vmem>>, vector<8x128xf32>
    %44 = arith.mulf %42, %29 : vector<8x128xf32>
    %45 = arith.addf %43, %44 : vector<8x128xf32>
    %c0_16 = arith.constant 0 : index
    %c0_17 = arith.constant 0 : index
    %46 = vector.load %arg5[%c0_16, %c0_17] : memref<8x128xf32, #tpu.memory_space<vmem>>, vector<8x128xf32>
    tpu.vector_store %arg5[%c0_16, %c0_17], %45 {strides = array<i32>} : memref<8x128xf32, #tpu.memory_space<vmem>>, vector<8x128xf32>,
    %c0_18 = arith.constant 0 : index
    %c0_19 = arith.constant 0 : index
    %47 = vector.load %arg6[%c0_18, %c0_19] : memref<8x128xf32, #tpu.memory_space<vmem>>, vector<8x128xf32>
    %48 = arith.addf %47, %42 : vector<8x128xf32>
    %c0_20 = arith.constant 0 : index
    %c0_21 = arith.constant 0 : index
    %49 = vector.load %arg6[%c0_20, %c0_21] : memref<8x128xf32, #tpu.memory_space<vmem>>, vector<8x128xf32>
    tpu.vector_store %arg6[%c0_20, %c0_21], %48 {strides = array<i32>} : memref<8x128xf32, #tpu.memory_space<vmem>>, vector<8x128xf32>,
    %50 = vector.shape_cast %14 : vector<8x128xf32> to vector<1x8x128xf32>
    %51 = vector.broadcast %50 : vector<1x8x128xf32> to vector<3x8x128xf32>
    %52 = arith.mulf %26, %51 : vector<3x8x128xf32>
    %c0_22 = arith.constant 0 : index
    %c0_23 = arith.constant 0 : index
    %c0_24 = arith.constant 0 : index
    %53 = vector.load %arg7[%c0_22, %c0_23, %c0_24] : memref<3x8x128xf32, #tpu.memory_space<vmem>>, vector<3x8x128xf32>
    %54 = arith.mulf %52, %10 : vector<3x8x128xf32>
    %55 = arith.addf %53, %54 : vector<3x8x128xf32>
    %c0_25 = arith.constant 0 : index
    %c0_26 = arith.constant 0 : index
    %c0_27 = arith.constant 0 : index
    %56 = vector.load %arg7[%c0_25, %c0_26, %c0_27] : memref<3x8x128xf32, #tpu.memory_space<vmem>>, vector<3x8x128xf32>
    tpu.vector_store %arg7[%c0_25, %c0_26, %c0_27], %55 {strides = array<i32>} : memref<3x8x128xf32, #tpu.memory_space<vmem>>, vector<3x8x128xf32>,
    %c0_28 = arith.constant 0 : index
    %c0_29 = arith.constant 0 : index
    %c0_30 = arith.constant 0 : index
    %57 = vector.load %arg8[%c0_28, %c0_29, %c0_30] : memref<3x8x128xf32, #tpu.memory_space<vmem>>, vector<3x8x128xf32>
    %58 = arith.addf %57, %52 : vector<3x8x128xf32>
    %c0_31 = arith.constant 0 : index
    %c0_32 = arith.constant 0 : index
    %c0_33 = arith.constant 0 : index
    %59 = vector.load %arg8[%c0_31, %c0_32, %c0_33] : memref<3x8x128xf32, #tpu.memory_space<vmem>>, vector<3x8x128xf32>
    tpu.vector_store %arg8[%c0_31, %c0_32, %c0_33], %58 {strides = array<i32>} : memref<3x8x128xf32, #tpu.memory_space<vmem>>, vector<3x8x128xf32>,
    %c0_i32_34 = arith.constant 0 : i32
    %60 = arith.cmpi eq, %arg1, %c0_i32_34 : i32
    %61 = arith.extui %60 : i1 to i32
    %c0_i32_35 = arith.constant 0 : i32
    %62 = arith.cmpi ne, %61, %c0_i32_35 : i32
    scf.if %62 {
      %c0_36 = arith.constant 0 : index
      %c0_37 = arith.constant 0 : index
      %63 = vector.load %arg5[%c0_36, %c0_37] : memref<8x128xf32, #tpu.memory_space<vmem>>, vector<8x128xf32>
      %cst_38 = arith.constant dense<0.000000e+00> : vector<128xf32>
      %64 = vector.multi_reduction <add>, %63, %cst_38 [0] : vector<8x128xf32> to vector<128xf32>
      %65 = vector.shape_cast %64 : vector<128xf32> to vector<1x128xf32>
      %c0_39 = arith.constant 0 : index
      %c0_40 = arith.constant 0 : index
      %c0_41 = arith.constant 0 : index
      %66 = vector.load %arg4[%c0_39, %c0_40, %c0_41] : memref<1x8x128xf32, #tpu.memory_space<vmem>>, vector<1x1x128xf32>
      %67 = vector.shape_cast %66 : vector<1x1x128xf32> to vector<1x128xf32>
      %68 = vector.shape_cast %65 : vector<1x128xf32> to vector<1x1x128xf32>
      tpu.vector_store %arg4[%c0_39, %c0_40, %c0_41], %68 {strides = array<i32>} : memref<1x8x128xf32, #tpu.memory_space<vmem>>, vector<1x1x128xf32>,
      %c0_42 = arith.constant 0 : index
      %c0_43 = arith.constant 0 : index
      %69 = vector.load %arg6[%c0_42, %c0_43] : memref<8x128xf32, #tpu.memory_space<vmem>>, vector<8x128xf32>
      %cst_44 = arith.constant dense<0.000000e+00> : vector<128xf32>
      %70 = vector.multi_reduction <add>, %69, %cst_44 [0] : vector<8x128xf32> to vector<128xf32>
      %71 = vector.shape_cast %70 : vector<128xf32> to vector<1x128xf32>
      %c0_45 = arith.constant 0 : index
      %c1 = arith.constant 1 : index
      %c0_46 = arith.constant 0 : index
      %72 = vector.load %arg4[%c0_45, %c1, %c0_46] : memref<1x8x128xf32, #tpu.memory_space<vmem>>, vector<1x1x128xf32>
      %73 = vector.shape_cast %72 : vector<1x1x128xf32> to vector<1x128xf32>
      %74 = vector.shape_cast %71 : vector<1x128xf32> to vector<1x1x128xf32>
      tpu.vector_store %arg4[%c0_45, %c1, %c0_46], %74 {strides = array<i32>} : memref<1x8x128xf32, #tpu.memory_space<vmem>>, vector<1x1x128xf32>,
      %c0_47 = arith.constant 0 : index
      %c0_48 = arith.constant 0 : index
      %c0_49 = arith.constant 0 : index
      %75 = vector.load %arg7[%c0_47, %c0_48, %c0_49] : memref<3x8x128xf32, #tpu.memory_space<vmem>>, vector<3x8x128xf32>
      %cst_50 = arith.constant dense<0.000000e+00> : vector<3x128xf32>
      %76 = vector.multi_reduction <add>, %75, %cst_50 [1] : vector<3x8x128xf32> to vector<3x128xf32>
      %c0_51 = arith.constant 0 : index
      %c2 = arith.constant 2 : index
      %c0_52 = arith.constant 0 : index
      %77 = vector.load %arg4[%c0_51, %c2, %c0_52] : memref<1x8x128xf32, #tpu.memory_space<vmem>>, vector<1x3x128xf32>
      %78 = vector.shape_cast %77 : vector<1x3x128xf32> to vector<3x128xf32>
      %79 = vector.shape_cast %76 : vector<3x128xf32> to vector<1x3x128xf32>
      tpu.vector_store %arg4[%c0_51, %c2, %c0_52], %79 {strides = array<i32>} : memref<1x8x128xf32, #tpu.memory_space<vmem>>, vector<1x3x128xf32>,
      %c0_53 = arith.constant 0 : index
      %c0_54 = arith.constant 0 : index
      %c0_55 = arith.constant 0 : index
      %80 = vector.load %arg8[%c0_53, %c0_54, %c0_55] : memref<3x8x128xf32, #tpu.memory_space<vmem>>, vector<3x8x128xf32>
      %cst_56 = arith.constant dense<0.000000e+00> : vector<3x128xf32>
      %81 = vector.multi_reduction <add>, %80, %cst_56 [1] : vector<3x8x128xf32> to vector<3x128xf32>
      %c0_57 = arith.constant 0 : index
      %c5 = arith.constant 5 : index
      %c0_58 = arith.constant 0 : index
      %82 = vector.load %arg4[%c0_57, %c5, %c0_58] : memref<1x8x128xf32, #tpu.memory_space<vmem>>, vector<1x3x128xf32>
      %83 = vector.shape_cast %82 : vector<1x3x128xf32> to vector<3x128xf32>
      %84 = vector.shape_cast %81 : vector<3x128xf32> to vector<1x3x128xf32>
      tpu.vector_store %arg4[%c0_57, %c5, %c0_58], %84 {strides = array<i32>} : memref<1x8x128xf32, #tpu.memory_space<vmem>>, vector<1x3x128xf32>,
    } else {
    }
    return
  }
  func.func @transform_0(%arg0: i32, %arg1: i32) -> (i32, i32, i32) {
    %c1_i32 = arith.constant 1 : i32
    %0 = arith.muli %arg0, %c1_i32 : i32
    %1 = arith.addi %0, %arg1 : i32
    %c0_i32 = arith.constant 0 : i32
    %c0_i32_0 = arith.constant 0 : i32
    %c0_i32_1 = arith.constant 0 : i32
    return %c0_i32, %1, %c0_i32_0 : i32, i32, i32
  }
  func.func @transform_1(%arg0: i32, %arg1: i32) -> (i32, i32, i32) {
    %c1_i32 = arith.constant 1 : i32
    %0 = arith.muli %arg0, %c1_i32 : i32
    %1 = arith.addi %0, %arg1 : i32
    %c0_i32 = arith.constant 0 : i32
    %c0_i32_0 = arith.constant 0 : i32
    %c0_i32_1 = arith.constant 0 : i32
    return %c0_i32, %1, %c0_i32_0 : i32, i32, i32
  }
  func.func @transform_2(%arg0: i32, %arg1: i32) -> (i32, i32, i32) {
    %c0_i32 = arith.constant 0 : i32
    %c0_i32_0 = arith.constant 0 : i32
    %c0_i32_1 = arith.constant 0 : i32
    return %arg0, %c0_i32, %c0_i32_0 : i32, i32, i32
  }
}

</mosaic_0001>

<llo_original>
// kernel: tpu_custom_call.1
$region0: #{tpu_custom_call.1}
  #allocation0 [shape = 'u32[]', space=smem, size = 0x4, offset = 0x4, fixed_abs, tag = 'smem constant byte address 0x4 - core index']
  #allocation1 [shape = 'u32[72,128]{1,0:T(1,128)}', space=vmem, size = 0x9000, scoped, tag = 'internal scratch']
  #allocation2 [shape = 'f32[8,128]{1,0:T(8,128)}', space=vmem, size = 0x1000, scoped, tag = 'scratch operand']
  #allocation3 [shape = 'f32[8,128]{1,0:T(8,128)}', space=vmem, size = 0x1000, scoped, tag = 'scratch operand']
  #allocation4 [shape = 'f32[3,8,128]{2,1,0:T(8,128)}', space=vmem, size = 0x3000, scoped, tag = 'scratch operand']
  #allocation5 [shape = 'f32[3,8,128]{2,1,0:T(8,128)}', space=vmem, size = 0x3000, scoped, tag = 'scratch operand']
  %s0 = inlined_call_operand.hbm [shape: f32[3,16,128], index: 0, kind: input, shape index: {}]
  %s1 = inlined_call_operand.hbm [shape: s32[1,16,128], index: 1, kind: input, shape index: {}]
  %s2 = inlined_call_operand.hbm [shape: f32[2,8,128], index: 2, kind: output, shape index: {}]
  %s3 = sld [smem:[#allocation0]]
  $region57: #{tpu_custom_call.1} parent=0
    _
  %s5 = ssub.s32 1, %s3
  %s6 = scalar_select 0, %s5, %s3
  $region1: #{tpu_custom_call.1} parent=0
    #allocation6 [shape = 'u8[24576]{0}', space=vmem, size = 0x6000, scoped, tag = 'input window, operand 0']
    #allocation7 [shape = 's32[2]{0}', space=sflag, size = 0x8, scoped, tag = 'scoped memory for tpu_custom_call.1']
    #allocation8 [shape = 's32[2]{0}', space=sflag, size = 0x8, scoped, tag = 'scoped memory for tpu_custom_call.1']
    #allocation9 [shape = 'u8[8192]{0}', space=vmem, size = 0x2000, scoped, tag = 'input window, operand 1']
    #allocation10 [shape = 's32[2]{0}', space=sflag, size = 0x8, scoped, tag = 'scoped memory for tpu_custom_call.1']
    #allocation11 [shape = 'u8[8192]{0}', space=vmem, size = 0x2000, scoped, tag = 'output window, operand 0']
    %7 = vsyncpa [#allocation7], 0
    %s8 = scalar_lea.sflag [#allocation7], 1
    %9 = vsyncpa %s8, 0
    %10 = vsyncpa [#allocation10], 0
    %s11 = scalar_lea.sflag [#allocation10], 1
    %12 = vsyncpa %s11, 0
    %13 = vsyncpa [#allocation8], 0
    %s14 = scalar_lea.sflag [#allocation8], 1
    %15 = vsyncpa %s14, 0
    loop: start=0, step=1, limit=4
    $region2: #{tpu_custom_call.1} parent=1 // loop_pre_header
      _
    $region3: #{tpu_custom_call.1} parent=1 // loop_header
      %s17 = sphi 0, %s21
      %p18 = scmp.ge.s32.totalorder %s17, 4
      %s24 = sphi 0, %s36
      %s25 = sphi 0, %s32
      %s26 = sphi 0, %s24
      %s27 = sphi 0, %s25
      %s28 = sphi 0, %s26
      %s29 = sphi 0, %s27
      %s41 = sphi 0, %s43
      %s44 = sphi 0, %s41
      %s45 = sphi 0, %s44
      %s61 = sphi 0, %s45
      %s69 = sphi 0, %s71
      %s72 = sphi 0, %s69
      %s73 = sphi 0, %s72
      %s89 = sphi 0, %s73
      %s95 = sphi 0, %s97
      %s98 = sphi 0, %s95
      %s99 = sphi 0, %s98
      %s115 = sphi 0, %s99
    $region4: #{tpu_custom_call.1} parent=1 // loop_header_branch
      %20 = sbr.rel (%p18) target = $region8
    $region5: #{tpu_custom_call.1} parent=1 // loop_body
      %s22 = ssub.s32 %s17, 1
      %s23 = ssub.s32 %s17, 2
      %s30 = sadd.s32 1, %s25
      %p31 = scmp.ge.s32.totalorder %s30, 1
      %s32 = scalar_select %p31, 0, %s30
      %s33 = sadd.s32 1, %s24
      %s34 = scalar_select %p31, %s33, %s24
      %p35 = scmp.ge.s32.totalorder %s34, 2
      %s36 = scalar_select %p35, 0, %s34
      %s37 = sadd.s32 %s24, %s25
      %s38 = sadd.s32 %s36, %s32
      %s39 = ssub.s32 %s37, %s38
      %p40 = scmp.eq.s32.totalorder %s39, 0
      %s42 = sadd.s32 %s41, 1
      %s43 = scalar_select %p40, %s41, %s42
      %p46 = pneg %p40
      %p47 = scmp.eq.s32.totalorder %s17, 1
      %p48 = por %p46, %p47
      %p49 = scmp.ne.s32.totalorder %s41, %s44
      %p50 = scmp.eq.s32.totalorder %s17, 0
      %p51 = por %p49, %p50
      %p52 = scmp.ne.s32.totalorder %s41, %s44
      %p53 = scmp.eq.s32.totalorder %s22, 1
      %p54 = por %p52, %p53
      %p55 = scmp.ne.s32.totalorder %s44, %s45
      %p56 = scmp.eq.s32.totalorder %s22, 0
      %p57 = por %p55, %p56
      %p58 = scmp.ne.s32.totalorder %s44, %s45
      %p59 = scmp.eq.s32.totalorder %s23, 1
      %p60 = por %p58, %p59
      %p62 = scmp.ne.s32.totalorder %s45, %s61
      %p63 = scmp.eq.s32.totalorder %s23, 0
      %p64 = por %p62, %p63
      %s65 = sadd.s32 %s24, %s25
      %s66 = sadd.s32 %s36, %s32
      %s67 = ssub.s32 %s65, %s66
      %p68 = scmp.eq.s32.totalorder %s67, 0
      %s70 = sadd.s32 %s69, 1
      %s71 = scalar_select %p68, %s69, %s70
      %p74 = pneg %p68
      %p75 = scmp.eq.s32.totalorder %s17, 1
      %p76 = por %p74, %p75
      %p77 = scmp.ne.s32.totalorder %s69, %s72
      %p78 = scmp.eq.s32.totalorder %s17, 0
      %p79 = por %p77, %p78
      %p80 = scmp.ne.s32.totalorder %s69, %s72
      %p81 = scmp.eq.s32.totalorder %s22, 1
      %p82 = por %p80, %p81
      %p83 = scmp.ne.s32.totalorder %s72, %s73
      %p84 = scmp.eq.s32.totalorder %s22, 0
      %p85 = por %p83, %p84
      %p86 = scmp.ne.s32.totalorder %s72, %s73
      %p87 = scmp.eq.s32.totalorder %s23, 1
      %p88 = por %p86, %p87
      %p90 = scmp.ne.s32.totalorder %s73, %s89
      %p91 = scmp.eq.s32.totalorder %s23, 0
      %p92 = por %p90, %p91
      %s93 = ssub.s32 %s24, %s36
      %p94 = scmp.eq.s32.totalorder %s93, 0
      %s96 = sadd.s32 %s95, 1
      %s97 = scalar_select %p94, %s95, %s96
      %p100 = pneg %p94
      %p101 = scmp.eq.s32.totalorder %s17, 1
      %p102 = por %p100, %p101
      %p103 = scmp.ne.s32.totalorder %s95, %s98
      %p104 = scmp.eq.s32.totalorder %s17, 0
      %p105 = por %p103, %p104
      %p106 = scmp.ne.s32.totalorder %s95, %s98
      %p107 = scmp.eq.s32.totalorder %s22, 1
      %p108 = por %p106, %p107
      %p109 = scmp.ne.s32.totalorder %s98, %s99
      %p110 = scmp.eq.s32.totalorder %s22, 0
      %p111 = por %p109, %p110
      %p112 = scmp.ne.s32.totalorder %s98, %s99
      %p113 = scmp.eq.s32.totalorder %s23, 1
      %p114 = por %p112, %p113
      %p116 = scmp.ne.s32.totalorder %s99, %s115
      %p117 = scmp.eq.s32.totalorder %s23, 0
      %p118 = por %p116, %p117
      %p119 = scmp.le.s32.totalorder 1, %s17
      %p120 = scmp.lt.s32.totalorder %s17, 3
      %p121 = pnand %p119, %p120
      %p122 = pneg %p121
      // Predicated region
      $region9: #{tpu_custom_call.1} parent=5 // pred_check
        _
      $region10: #{tpu_custom_call.1} parent=5 // pred_check_branch
        %124 = sbr.rel (%p121) target = $region12
      $region11: #{tpu_custom_call.1} parent=5 // pred_region
        %s125 = ssub.s32 %s17, 1
      $region12: #{tpu_custom_call.1} parent=5 // pred_fallthru
        _
      %p126 = scmp.lt.s32.totalorder %s17, 2
      // Predicated region
      $region13: #{tpu_custom_call.1} parent=5 // pred_check
        %p127 = pneg %p126
      $region14: #{tpu_custom_call.1} parent=5 // pred_check_branch
        %129 = sbr.rel (%p127) target = $region16
      $region15: #{tpu_custom_call.1} parent=5 // pred_region
        // Predicated region
        $region17: #{tpu_custom_call.1} parent=15 // pred_check
          %p130 = pneg %p51
        $region18: #{tpu_custom_call.1} parent=15 // pred_check_branch
          %132 = sbr.rel (%p130) target = $region20
        $region19: #{tpu_custom_call.1} parent=15 // pred_region
          %s133 = sand.u32 %s41, 1
          %s134 = scalar_lea.sflag [#allocation7], %s133
          %s135 = sand.u32 %s41, 1
          %s136 = smul.addr %s135, 24
          %s137 = scalar_lea.vmem [#allocation6], %s136
          %s138 = sadd.s32 %s24, %s25
          %140 = vsyncadd %s134, 0
          %s141 = smul.addr %s138, 8
          %s142 = scalar_lea.hbm %s0, %s141
          %s143 = sshll.u32 %s142, 4
          %s144 = int_to_ptr.hbm [resolvable:$true] %s143
          %s145 = sshll.u32 %s137, 4
          %s146 = int_to_ptr.vmem [resolvable:$true] %s145
          %151 = dma.hbm_to_vmem [thread:$0]  %s144, 384, %s146, %s134, 256, 128, 8
        $region20: #{tpu_custom_call.1} parent=15 // pred_fallthru
          _
        // Predicated region
        $region21: #{tpu_custom_call.1} parent=15 // pred_check
          %p152 = pneg %p79
        $region22: #{tpu_custom_call.1} parent=15 // pred_check_branch
          %154 = sbr.rel (%p152) target = $region24
        $region23: #{tpu_custom_call.1} parent=15 // pred_region
          %s155 = sand.u32 %s69, 1
          %s156 = scalar_lea.sflag [#allocation10], %s155
          %s157 = sand.u32 %s69, 1
          %s158 = smul.addr %s157, 8
          %s159 = scalar_lea.vmem [#allocation9], %s158
          %s160 = sadd.s32 %s24, %s25
          %162 = vsyncadd %s156, 0
          %s163 = smul.addr %s160, 8
          %s164 = scalar_lea.hbm %s1, %s163
          %s166 = sshll.u32 %s164, 4
          %s167 = int_to_ptr.hbm [resolvable:$true] %s166
          %s168 = sshll.u32 %s159, 4
          %s169 = int_to_ptr.vmem [resolvable:$true] %s168
          %171 = dma.hbm_to_vmem [thread:$0]  %s167, 128, %s169, %s156
        $region24: #{tpu_custom_call.1} parent=15 // pred_fallthru
          _
      $region16: #{tpu_custom_call.1} parent=5 // pred_fallthru
        _
      %p172 = scmp.le.s32.totalorder 1, %s17
      %p173 = scmp.lt.s32.totalorder %s17, 3
      %p174 = pnand %p172, %p173
      %p175 = pneg %p174
      // Predicated region
      $region25: #{tpu_custom_call.1} parent=5 // pred_check
        _
      $region26: #{tpu_custom_call.1} parent=5 // pred_check_branch
        %177 = sbr.rel (%p174) target = $region28
      $region27: #{tpu_custom_call.1} parent=5 // pred_region
        %s178 = ssub.s32 %s17, 1
        %s179 = sand.u32 %s44, 1
        %s180 = scalar_lea.sflag [#allocation7], %s179
        %s181 = sand.u32 %s44, 1
        %s182 = smul.addr %s181, 24
        %s183 = scalar_lea.vmem [#allocation6], %s182
        // Predicated region
        $region29: #{tpu_custom_call.1} parent=27 // pred_check
          %p184 = pneg %p57
        $region30: #{tpu_custom_call.1} parent=27 // pred_check_branch
          %186 = sbr.rel (%p184) target = $region32
        $region31: #{tpu_custom_call.1} parent=27 // pred_region
          %188 = dma.done %s180, 384
        $region32: #{tpu_custom_call.1} parent=27 // pred_fallthru
          _
        %s189 = sand.u32 %s72, 1
        %s190 = scalar_lea.sflag [#allocation10], %s189
        %s191 = sand.u32 %s72, 1
        %s192 = smul.addr %s191, 8
        %s193 = scalar_lea.vmem [#allocation9], %s192
        // Predicated region
        $region33: #{tpu_custom_call.1} parent=27 // pred_check
          %p194 = pneg %p85
        $region34: #{tpu_custom_call.1} parent=27 // pred_check_branch
          %196 = sbr.rel (%p194) target = $region36
        $region35: #{tpu_custom_call.1} parent=27 // pred_region
          %198 = dma.done %s190, 128
        $region36: #{tpu_custom_call.1} parent=27 // pred_fallthru
          _
        %s199 = sand.u32 %s44, 1
        %s200 = scalar_lea.sflag [#allocation7], %s199
        %s201 = sand.u32 %s44, 1
        %s202 = smul.addr %s201, 24
        %s203 = scalar_lea.vmem [#allocation6], %s202
        %p204 = pneg %p57
        %p205 = pneg %p54
        %s206 = sand.u32 %s72, 1
        %s207 = scalar_lea.sflag [#allocation10], %s206
        %s208 = sand.u32 %s72, 1
        %s209 = smul.addr %s208, 8
        %s210 = scalar_lea.vmem [#allocation9], %s209
        %p211 = pneg %p85
        %p212 = pneg %p82
        %p213 = pneg %p111
        %p214 = pneg %p108
        %s215 = sand.u32 %s98, 1
        %s216 = scalar_lea.sflag [#allocation8], %s215
        %s217 = sand.u32 %s98, 1
        %s218 = smul.addr %s217, 8
        %s219 = scalar_lea.vmem [#allocation11], %s218
        %s220 = sadd.s32 %s26, %s27
        %s221 = sadd.s32 %s26, %s27
        %p222 = scmp.eq.s32.totalorder %s27, 0
        // Predicated region
        $region37: #{tpu_custom_call.1} parent=27 // pred_check
          %p223 = pneg %p222
        $region38: #{tpu_custom_call.1} parent=27 // pred_check_branch
          %225 = sbr.rel (%p223) target = $region40
        $region39: #{tpu_custom_call.1} parent=27 // pred_region
          %226 = vst [vmem:[#allocation2] sm:$0xff] 0.0
          %227 = vst [vmem:[#allocation3] sm:$0xff] 0.0
          %228 = vst [vmem:[#allocation4] sm:$0xff] 0.0
          %229 = vst [vmem:[#allocation4 + $0x8] sm:$0xff] 0.0
          %230 = vst [vmem:[#allocation4 + $0x10] sm:$0xff] 0.0
          %231 = vst [vmem:[#allocation5] sm:$0xff] 0.0
          %232 = vst [vmem:[#allocation5 + $0x8] sm:$0xff] 0.0
          %233 = vst [vmem:[#allocation5 + $0x10] sm:$0xff] 0.0
        $region40: #{tpu_custom_call.1} parent=27 // pred_fallthru
          _
        %v234 = vld [vmem:[%s183] sm:$0xff]
        %v235 = vld [vmem:[%s183 + $0x8] sm:$0xff]
        %v236 = vld [vmem:[%s183 + $0x10] sm:$0xff]
        %v237 = vld [vmem:[%s193] sm:$0xff]
        %vm238 = vcmp.eq.s32.totalorder %v237, 0
        %vm239 = vcmp.eq.s32.totalorder %v237, 1
        %vm240 = vcmp.eq.s32.totalorder %v237, 2
        %v241 = vsel %vm238, 1, 0
        %v242 = vsel %vm239, 1, 0
        %v243 = vsel %vm240, 1, 0
        %v244 = vcvt.s32.f32 %v241
        %v245 = vcvt.s32.f32 %v242
        %v246 = vcvt.s32.f32 %v243
        %vm247 = vcmp.ge.s32.totalorder %v237, 0
        %v248 = vsel %vm247, 1, 0
        %v249 = vcvt.s32.f32 %v248
        %v250 = vmax.f32 %v234, %v235
        %v251 = vmax.f32 %v250, %v236
        %v252 = vsub.f32 %v234, %v251
        %v253 = vsub.f32 %v235, %v251
        %v254 = vsub.f32 %v236, %v251
        %v255 = vmul.f32 %v252, 1.442695
        %v256 = vpow.pop %v255
        %v257 = vmul.f32 %v253, 1.442695
        %v258 = vpow.pop %v257
        %v259 = vmul.f32 %v254, 1.442695
        %v260 = vpow.pop %v259
        %v261 = vadd.f32 %v256, %v258
        %v262 = vadd.f32 %v261, %v260
        %v263 = vlog2.pop %v262
        %v264 = vmul.f32 %v263, 0.6931472
        %v265 = vadd.f32 %v251, %v264
        %v266 = vrcp.pop %v262
        %v267 = vmul.f32 %v256, %v266
        %v268 = vmul.f32 %v258, %v266
        %v269 = vmul.f32 %v260, %v266
        %v270 = vmul.f32 %v244, %v234
        %v271 = vmul.f32 %v245, %v235
        %v272 = vmul.f32 %v246, %v236
        %v273 = vadd.f32 %v270, %v271
        %v274 = vadd.f32 %v273, %v272
        %v275 = vsub.f32 %v265, %v274
        %v276 = vsel %vm238, 3.8, 0.0
        %v277 = vsel %vm239, 3.8, %v276
        %v278 = vsel %vm240, 1.0, %v277
        %v279 = vld [vmem:[#allocation2] sm:$0xff]
        %v280 = vmul.f32 %v278, %v275
        %v281 = vadd.f32 %v279, %v280
        %282 = vst [vmem:[#allocation2] sm:$0xff] %v281
        %v283 = vld [vmem:[#allocation3] sm:$0xff]
        %v284 = vadd.f32 %v283, %v278
        %285 = vst [vmem:[#allocation3] sm:$0xff] %v284
        %v286 = vmul.f32 %v267, %v249
        %v287 = vmul.f32 %v268, %v249
        %v288 = vmul.f32 %v269, %v249
        %v289 = vld [vmem:[#allocation4] sm:$0xff]
        %v290 = vld [vmem:[#allocation4 + $0x8] sm:$0xff]
        %v291 = vld [vmem:[#allocation4 + $0x10] sm:$0xff]
        %v292 = vmul.f32 %v286, %v244
        %v293 = vmul.f32 %v287, %v245
        %v294 = vmul.f32 %v288, %v246
        %v295 = vadd.f32 %v289, %v292
        %v296 = vadd.f32 %v290, %v293
        %v297 = vadd.f32 %v291, %v294
        %298 = vst [vmem:[#allocation4] sm:$0xff] %v295
        %299 = vst [vmem:[#allocation4 + $0x8] sm:$0xff] %v296
        %300 = vst [vmem:[#allocation4 + $0x10] sm:$0xff] %v297
        %v301 = vld [vmem:[#allocation5] sm:$0xff]
        %v302 = vld [vmem:[#allocation5 + $0x8] sm:$0xff]
        %v303 = vld [vmem:[#allocation5 + $0x10] sm:$0xff]
        %v304 = vadd.f32 %v301, %v286
        %v305 = vadd.f32 %v302, %v287
        %v306 = vadd.f32 %v303, %v288
        %307 = vst [vmem:[#allocation5] sm:$0xff] %v304
        %308 = vst [vmem:[#allocation5 + $0x8] sm:$0xff] %v305
        %309 = vst [vmem:[#allocation5 + $0x10] sm:$0xff] %v306
        // Predicated region
        $region41: #{tpu_custom_call.1} parent=27 // pred_check
          %p310 = pneg %p222
        $region42: #{tpu_custom_call.1} parent=27 // pred_check_branch
          %312 = sbr.rel (%p310) target = $region44
        $region43: #{tpu_custom_call.1} parent=27 // pred_region
          %v313 = vld [vmem:[#allocation2] sm:$0xff]
          %v314 = vrot.slane %v313, 4
          %v315 = vadd.f32 %v313, %v314
          %v316 = vrot.slane %v315, 2
          %v317 = vadd.f32 %v315, %v316
          %v318 = vrot.slane %v317, 1
          %v319 = vadd.f32 %v317, %v318
          %320 = vst [vmem:[%s219] sm:$0x1] %v319
          %v321 = vld [vmem:[#allocation3] sm:$0xff]
          %v322 = vrot.slane %v321, 4
          %v323 = vadd.f32 %v321, %v322
          %v324 = vrot.slane %v323, 2
          %v325 = vadd.f32 %v323, %v324
          %v326 = vrot.slane %v325, 1
          %v327 = vadd.f32 %v325, %v326
          %328 = vst [vmem:[%s219 + $0x1] sm:$0x1] %v327
          %v329 = vld [vmem:[#allocation4] sm:$0xff]
          %v330 = vld [vmem:[#allocation4 + $0x8] sm:$0xff]
          %v331 = vld [vmem:[#allocation4 + $0x10] sm:$0xff]
          %v332 = vrot.slane %v329, 4
          %v333 = vadd.f32 %v329, %v332
          %v334 = vrot.slane %v333, 2
          %v335 = vadd.f32 %v333, %v334
          %v336 = vrot.slane %v335, 1
          %v337 = vadd.f32 %v335, %v336
          %v338 = vrot.slane %v330, 4
          %v339 = vadd.f32 %v330, %v338
          %v340 = vrot.slane %v339, 2
          %v341 = vadd.f32 %v339, %v340
          %v342 = vrot.slane %v341, 1
          %v343 = vadd.f32 %v341, %v342
          %v344 = vrot.slane %v331, 4
          %v345 = vadd.f32 %v331, %v344
          %v346 = vrot.slane %v345, 2
          %v347 = vadd.f32 %v345, %v346
          %v348 = vrot.slane %v347, 1
          %v349 = vadd.f32 %v347, %v348
          %vm353 = vcmask 1041409
          %v354 = vsel %vm353, %v343, %v337
          %vm355 = vcmask 1042434
          %v356 = vsel %vm355, %v349, %v354
          %358 = vst [vmem:[%s219 + $0x2] sm:$0x7] %v356
          %v359 = vld [vmem:[#allocation5] sm:$0xff]
          %v360 = vld [vmem:[#allocation5 + $0x8] sm:$0xff]
          %v361 = vld [vmem:[#allocation5 + $0x10] sm:$0xff]
          %v362 = vrot.slane %v359, 4
          %v363 = vadd.f32 %v359, %v362
          %v364 = vrot.slane %v363, 2
          %v365 = vadd.f32 %v363, %v364
          %v366 = vrot.slane %v365, 1
          %v367 = vadd.f32 %v365, %v366
          %v368 = vrot.slane %v360, 4
          %v369 = vadd.f32 %v360, %v368
          %v370 = vrot.slane %v369, 2
          %v371 = vadd.f32 %v369, %v370
          %v372 = vrot.slane %v371, 1
          %v373 = vadd.f32 %v371, %v372
          %v374 = vrot.slane %v361, 4
          %v375 = vadd.f32 %v361, %v374
          %v376 = vrot.slane %v375, 2
          %v377 = vadd.f32 %v375, %v376
          %v378 = vrot.slane %v377, 1
          %v379 = vadd.f32 %v377, %v378
          %v383 = vsel %vm353, %v373, %v367
          %v384 = vsel %vm355, %v379, %v383
          %386 = vst [vmem:[%s219 + $0x5] sm:$0x7] %v384
        $region44: #{tpu_custom_call.1} parent=27 // pred_fallthru
          _
        %s387 = sand.u32 %s98, 1
        %s388 = scalar_lea.sflag [#allocation8], %s387
        %s389 = sand.u32 %s98, 1
        %s390 = smul.addr %s389, 8
        %s391 = scalar_lea.vmem [#allocation11], %s390
        // Predicated region
        $region45: #{tpu_custom_call.1} parent=27 // pred_check
          %p392 = pneg %p108
        $region46: #{tpu_custom_call.1} parent=27 // pred_check_branch
          %394 = sbr.rel (%p392) target = $region48
        $region47: #{tpu_custom_call.1} parent=27 // pred_region
          %396 = vsyncadd %s388, 0
          %s397 = smul.addr %s26, 8
          %s398 = scalar_lea.hbm %s2, %s397
          %s400 = sshll.u32 %s391, 4
          %s401 = int_to_ptr.vmem [resolvable:$true] %s400
          %s402 = sshll.u32 %s398, 4
          %s403 = int_to_ptr.hbm [resolvable:$true] %s402
          %405 = dma.vmem_to_hbm [thread:$0]  %s401, 128, %s403, %s388
        $region48: #{tpu_custom_call.1} parent=27 // pred_fallthru
          _
      $region28: #{tpu_custom_call.1} parent=5 // pred_fallthru
        _
      %p406 = scmp.le.s32.totalorder 2, %s17
      // Predicated region
      $region49: #{tpu_custom_call.1} parent=5 // pred_check
        %p407 = pneg %p406
      $region50: #{tpu_custom_call.1} parent=5 // pred_check_branch
        %409 = sbr.rel (%p407) target = $region52
      $region51: #{tpu_custom_call.1} parent=5 // pred_region
        %s410 = ssub.s32 %s17, 2
        // Predicated region
        $region53: #{tpu_custom_call.1} parent=51 // pred_check
          %p411 = pneg %p114
        $region54: #{tpu_custom_call.1} parent=51 // pred_check_branch
          %413 = sbr.rel (%p411) target = $region56
        $region55: #{tpu_custom_call.1} parent=51 // pred_region
          %s414 = sand.u32 %s99, 1
          %s415 = scalar_lea.sflag [#allocation8], %s414
          %s416 = sand.u32 %s99, 1
          %s417 = smul.addr %s416, 8
          %s418 = scalar_lea.vmem [#allocation11], %s417
          %420 = dma.done %s415, 128
        $region56: #{tpu_custom_call.1} parent=51 // pred_fallthru
          _
      $region52: #{tpu_custom_call.1} parent=5 // pred_fallthru
        _
    $region6: #{tpu_custom_call.1} parent=1 // loop_footer
      %s21 = sadd.s32 1, %s17
    $region7: #{tpu_custom_call.1} parent=1 // loop_footer_branch
      %16 = sbr.rel target = $region3
    $region8: #{tpu_custom_call.1} parent=1 // loop_exit
      _
    %421 = vsyncpa [#allocation7], 1
    %s422 = scalar_lea.sflag [#allocation7], 1
    %423 = vsyncpa %s422, 1
    %424 = vsyncpa [#allocation10], 1
    %s425 = scalar_lea.sflag [#allocation10], 1
    %426 = vsyncpa %s425, 1
    %427 = vsyncpa [#allocation8], 1
    %s428 = scalar_lea.sflag [#allocation8], 1
    %429 = vsyncpa %s428, 1

</llo_original>
